<compile_context>
chip_gen: v6e
topology: v6e:2x2x1
jax: 0.10.0
libtpu: 0.0.40
codegen_flags: <defaults>
</compile_context>

<pallas_src>
import jax
import jax.numpy as jnp
from jax.experimental import pallas as pl
from jax.experimental.pallas import tpu as pltpu

HIDDEN = 64          # model hidden width (PyTorch spec)
HIDDEN_PAD = 128     # lane-dense hidden width (zero padded -> identical math)
NEG_BIG = -1e30      # bias of padded action columns -> softmax prob exactly 0


def _round_up(x, m):
    return (x + m - 1) // m * m


def _cdiv(a, b):
    return (a + b - 1) // b


def _mlp_softmax_kernel(x_ref, w1_ref, b1_ref, w2_ref, b2_ref, w3_ref, b3_ref,
                        out_ref):
    """Fused 3-layer MLP + softmax over one batch tile.

    x_ref:  [TB, S]  f32
    w1_ref: [S, 128] f32   (layer 1 in f32: K=S tiny, keeps state precision)
    w2_ref: [128,128] bf16, w3_ref: [128, A_pad] bf16 (MXU bf16, f32 accumulate)
    b*_ref: [1, 128]/[1, A_pad] f32
    out_ref:[TB, num_actions] f32  (compact output -> 16x less HBM writeback)
    """
    x = x_ref[...]                                                    # [TB, S] f32

    h1 = jnp.dot(x, w1_ref[...], preferred_element_type=jnp.float32)
    h1 = jnp.maximum(h1 + b1_ref[...], 0.0)                           # [TB, 128]

    h2 = jnp.dot(h1.astype(jnp.bfloat16), w2_ref[...],
                 preferred_element_type=jnp.float32)
    h2 = jnp.maximum(h2 + b2_ref[...], 0.0)                           # [TB, 128]

    logits = jnp.dot(h2.astype(jnp.bfloat16), w3_ref[...],
                     preferred_element_type=jnp.float32)
    logits = logits + b3_ref[...]                                     # [TB, A_pad]

    # Numerically-stable softmax over the last axis (== torch.softmax(dim=-1)).
    # Padded action columns have bias -1e30 -> exp underflows to exactly 0, so
    # softmax over A_pad lanes == softmax over the real num_actions columns.
    m = jnp.max(logits, axis=-1, keepdims=True)
    e = jnp.exp(logits - m)
    denom = jnp.sum(e, axis=-1, keepdims=True)
    probs = e / denom        # exact normalization: sums to 1 to f32 precision
    # TODO(synk): if EUP exp ever binds (post writeback-fix), pack real action
    # columns lane-dense before the softmax (segmented max/sum via pltpu.roll).

    num_actions = out_ref.shape[-1]
    out_ref[...] = probs[:, :num_actions].astype(out_ref.dtype)


def prepare_params(params):
    """Pad to lane-dense 128-wide shapes; cast layer-2/3 weights to bf16.

    Zero-padding the hidden width (weights/biases 0, ReLU(0)=0) and using
    -1e30 as the bias of padded action columns keeps the forward pass
    equivalent to the unpadded model.  w1 stays f32 (layer 1 runs in f32);
    b3 stays f32 so the real bias is never folded through a bf16 path.
    """
    w1, b1 = params["w1"], params["b1"]
    w2, b2 = params["w2"], params["b2"]
    w3, b3 = params["w3"], params["b3"]
    S, H = w1.shape
    A = w3.shape[1]
    act_pad = max(128, _round_up(A, 128))

    w1p = jnp.zeros((S, HIDDEN_PAD), jnp.float32).at[:, :H].set(w1)
    b1p = jnp.zeros((1, HIDDEN_PAD), jnp.float32).at[:, :H].set(b1)
    w2p = jnp.zeros((HIDDEN_PAD, HIDDEN_PAD), jnp.float32).at[:H, :H].set(w2)
    b2p = jnp.zeros((1, HIDDEN_PAD), jnp.float32).at[:, :H].set(b2)
    w3p = jnp.zeros((HIDDEN_PAD, act_pad), jnp.float32).at[:H, :A].set(w3)
    b3p = jnp.full((1, act_pad), NEG_BIG, jnp.float32).at[:, :A].set(b3)

    return {
        "w1": w1p,                          # f32: layer 1 stays f32
        "b1": b1p,
        "w2": w2p.astype(jnp.bfloat16), "b2": b2p,
        "w3": w3p.astype(jnp.bfloat16), "b3": b3p,
        "num_actions": A,
    }


def pi_forward(states, prepared, *, tile_b=1024):
    """Fused MLP + softmax forward pass.

    Args:
      states:   f32[B, state_dims]
      prepared: output of prepare_params().
      tile_b:   max batch rows per grid step.
    Returns:
      f32[B, num_actions] action probabilities (rows sum to 1).
    """
    w1, b1 = prepared["w1"], prepared["b1"]
    w2, b2 = prepared["w2"], prepared["b2"]
    w3, b3 = prepared["w3"], prepared["b3"]
    A = prepared["num_actions"]

    B, S = states.shape

    # Adaptive tile: minimize padding waste (< 8 rows per step) instead of
    # rounding B up to a fixed 512-row tile.
    n_steps = max(1, _cdiv(B, tile_b))
    # v7x: guarantee >= 2 grid steps so the "parallel" axis shards across both
    # TensorCores; costs only ~0.35 us extra on single-TC v5e/v6e.
    if B > 256 and n_steps < 2:
        n_steps = 2
    TB = _round_up(_cdiv(B, n_steps), 8)
    B_pad = n_steps * TB
    if B_pad != B:
        states = jnp.pad(states, ((0, B_pad - B), (0, 0)))

    hp = HIDDEN_PAD
    ap = w3.shape[1]
    flops = 2 * B_pad * (S * hp + hp * hp + hp * ap)
    transcendentals = B_pad * (ap + 1)                  # exp + reciprocal / row
    bytes_accessed = (B_pad * S * 4 + B_pad * A * 4     # states in, probs out
                      + w1.size * 4 + b1.size * 4
                      + w2.size * 2 + b2.size * 4
                      + w3.size * 2 + b3.size * 4)

    full = lambda i: (0, 0)   # weights: same block every step -> VMEM-resident
    out = pl.pallas_call(
        _mlp_softmax_kernel,
        out_shape=jax.ShapeDtypeStruct((B_pad, A), jnp.float32),
        grid=(n_steps,),
        in_specs=[
            pl.BlockSpec((TB, S), lambda i: (i, 0)),
            pl.BlockSpec(w1.shape, full),
            pl.BlockSpec(b1.shape, full),
            pl.BlockSpec(w2.shape, full),
            pl.BlockSpec(b2.shape, full),
            pl.BlockSpec(w3.shape, full),
            pl.BlockSpec(b3.shape, full),
        ],
        out_specs=pl.BlockSpec((TB, A), lambda i: (i, 0)),
        compiler_params=pltpu.CompilerParams(
            dimension_semantics=("parallel",)),
        cost_estimate=pl.CostEstimate(
            flops=int(flops),
            transcendentals=int(transcendentals),
            bytes_accessed=int(bytes_accessed)),
    )(states, w1, b1, w2, b2, w3, b3)

    return out if B_pad == B else out[:B]


def init_params(key, state_dims, num_actions, hidden=HIDDEN):
    """Deterministic init mirroring nn.Linear's default U(-1/sqrt(fan_in), ...).
    Weights stored transposed vs. PyTorch ([in, out]) so y = x @ W + b."""
    def linear(k, fan_in, fan_out):
        kw, kb = jax.random.split(k)
        bound = 1.0 / jnp.sqrt(jnp.float32(fan_in))
        w = jax.random.uniform(kw, (fan_in, fan_out), jnp.float32, -bound, bound)
        b = jax.random.uniform(kb, (1, fan_out), jnp.float32, -bound, bound)
        return w, b

    k1, k2, k3 = jax.random.split(key, 3)
    w1, b1 = linear(k1, state_dims, hidden)
    w2, b2 = linear(k2, hidden, hidden)
    w3, b3 = linear(k3, hidden, num_actions)
    return {"w1": w1, "b1": b1, "w2": w2, "b2": b2, "w3": w3, "b3": b3}


def _ref_forward_f32(states, params):
    h1 = jnp.maximum(states @ params["w1"] + params["b1"], 0.0)
    h2 = jnp.maximum(h1 @ params["w2"] + params["b2"], 0.0)
    logits = h2 @ params["w3"] + params["b3"]
    return jax.nn.softmax(logits, axis=-1)


def _ref_forward_mixed(states, params):
    """Reference matching the kernel's precision: f32 layer 1, bf16 layers 2/3."""
    bf = jnp.bfloat16
    h1 = jnp.maximum(
        jnp.dot(states, params["w1"],
                preferred_element_type=jnp.float32) + params["b1"], 0.0)
    h2 = jnp.maximum(
        jnp.dot(h1.astype(bf), params["w2"].astype(bf),
                preferred_element_type=jnp.float32) + params["b2"], 0.0)
    logits = jnp.dot(h2.astype(bf), params["w3"].astype(bf),
                     preferred_element_type=jnp.float32) + params["b3"]
    return jax.nn.softmax(logits, axis=-1)


# TODO(synk): update()/Adam training step and the host-side np.random.choice
# action sampling from __call__ are not part of the forward kernel.

if __name__ == "__main__":
    state_dims = 16
    num_actions = 8
    batch = 2

    root = jax.random.PRNGKey(0)
    k_params, k_states = jax.random.split(root)

    params = init_params(k_params, state_dims, num_actions)
    prepared = prepare_params(params)
    states = jax.random.normal(k_states, (batch, state_dims), jnp.float32)

    probs = jax.block_until_ready(pi_forward(states, prepared))

    ref_mixed = _ref_forward_mixed(states, params)
    ref_f32 = _ref_forward_f32(states, params)

    assert probs.shape == (batch, num_actions)
    # Exact normalization (f32 divide) -> rows sum to 1 to f32 precision.
    assert jnp.allclose(jnp.sum(probs, axis=-1), 1.0, atol=1e-5)
    assert jnp.allclose(probs, ref_mixed, atol=2e-3)
    assert jnp.allclose(probs, ref_f32, atol=2e-2)

    # Larger, awkward batch: exercises adaptive TB (1048 -> TB=528, 8 padded
    # rows total), the multi-step grid and the forced >=2-step v7x path.
    big_states = jax.random.normal(jax.random.PRNGKey(1), (1048, state_dims),
                                   jnp.float32)
    big_probs = jax.block_until_ready(pi_forward(big_states, prepared))
    assert big_probs.shape == (1048, num_actions)
    assert jnp.allclose(jnp.sum(big_probs, axis=-1), 1.0, atol=1e-5)
    assert jnp.allclose(big_probs, _ref_forward_mixed(big_states, params),
                        atol=2e-3)

    print("KERNEL_OK")
</pallas_src>

<mosaic_0001>
module attributes {stable_mosaic.version = 11 : i64} {
  func.func @_mlp_softmax_kernel(%arg0: i32, %arg1: memref<8x16xf32, #tpu.memory_space<vmem>>, %arg2: memref<16x128xf32, #tpu.memory_space<vmem>>, %arg3: memref<1x128xf32, #tpu.memory_space<vmem>>, %arg4: memref<128x128xbf16, #tpu.memory_space<vmem>>, %arg5: memref<1x128xf32, #tpu.memory_space<vmem>>, %arg6: memref<128x128xbf16, #tpu.memory_space<vmem>>, %arg7: memref<1x128xf32, #tpu.memory_space<vmem>>, %arg8: memref<8x8xf32, #tpu.memory_space<vmem>>) attributes {dimension_semantics = [#tpu.dimension_semantics<parallel>], iteration_bounds = array<i64: 1>, scalar_prefetch = 0 : i64, scratch_operands = 0 : i64, tpu.core_type = #tpu.core_type<tc>, window_params = [{transform_indices = @transform_0, window_bounds = array<i64: 8, 16>}, {pipeline_mode = #tpu.pipeline_mode<synchronous>, transform_indices = @transform_1, window_bounds = array<i64: 16, 128>}, {pipeline_mode = #tpu.pipeline_mode<synchronous>, transform_indices = @transform_2, window_bounds = array<i64: 1, 128>}, {pipeline_mode = #tpu.pipeline_mode<synchronous>, transform_indices = @transform_3, window_bounds = array<i64: 128, 128>}, {pipeline_mode = #tpu.pipeline_mode<synchronous>, transform_indices = @transform_4, window_bounds = array<i64: 1, 128>}, {pipeline_mode = #tpu.pipeline_mode<synchronous>, transform_indices = @transform_5, window_bounds = array<i64: 128, 128>}, {pipeline_mode = #tpu.pipeline_mode<synchronous>, transform_indices = @transform_6, window_bounds = array<i64: 1, 128>}, {transform_indices = @transform_7, window_bounds = array<i64: 8, 8>}]} {
    %c0 = arith.constant 0 : index
    %c0_0 = arith.constant 0 : index
    %0 = vector.load %arg1[%c0, %c0_0] : memref<8x16xf32, #tpu.memory_space<vmem>>, vector<8x16xf32>
    %c0_1 = arith.constant 0 : index
    %c0_2 = arith.constant 0 : index
    %1 = vector.load %arg2[%c0_1, %c0_2] : memref<16x128xf32, #tpu.memory_space<vmem>>, vector<16x128xf32>
    %cst = arith.constant dense<0.000000e+00> : vector<8x128xf32>
    %2 = tpu.matmul %0, %1, %cst {dimension_numbers = #tpu.dot_dimension_numbers<[1], [0], [0], [1], [0, 0, 1, 1], [], []>} : vector<8x16xf32>, vector<16x128xf32>, vector<8x128xf32> -> vector<8x128xf32>
    %c0_3 = arith.constant 0 : index
    %c0_4 = arith.constant 0 : index
    %3 = vector.load %arg3[%c0_3, %c0_4] : memref<1x128xf32, #tpu.memory_space<vmem>>, vector<1x128xf32>
    %4 = vector.broadcast %3 : vector<1x128xf32> to vector<8x128xf32>
    %5 = arith.addf %2, %4 : vector<8x128xf32>
    %cst_5 = arith.constant 0.000000e+00 : f32
    %6 = vector.broadcast %cst_5 : f32 to vector<8x128xf32>
    %7 = arith.maximumf %5, %6 : vector<8x128xf32>
    %8 = arith.truncf %7 : vector<8x128xf32> to vector<8x128xbf16>
    %c0_6 = arith.constant 0 : index
    %c0_7 = arith.constant 0 : index
    %9 = vector.load %arg4[%c0_6, %c0_7] : memref<128x128xbf16, #tpu.memory_space<vmem>>, vector<128x128xbf16>
    %cst_8 = arith.constant dense<0.000000e+00> : vector<8x128xf32>
    %10 = tpu.matmul %8, %9, %cst_8 {dimension_numbers = #tpu.dot_dimension_numbers<[1], [0], [0], [1], [0, 0, 1, 1], [], []>} : vector<8x128xbf16>, vector<128x128xbf16>, vector<8x128xf32> -> vector<8x128xf32>
    %c0_9 = arith.constant 0 : index
    %c0_10 = arith.constant 0 : index
    %11 = vector.load %arg5[%c0_9, %c0_10] : memref<1x128xf32, #tpu.memory_space<vmem>>, vector<1x128xf32>
    %12 = vector.broadcast %11 : vector<1x128xf32> to vector<8x128xf32>
    %13 = arith.addf %10, %12 : vector<8x128xf32>
    %cst_11 = arith.constant 0.000000e+00 : f32
    %14 = vector.broadcast %cst_11 : f32 to vector<8x128xf32>
    %15 = arith.maximumf %13, %14 : vector<8x128xf32>
    %16 = arith.truncf %15 : vector<8x128xf32> to vector<8x128xbf16>
    %c0_12 = arith.constant 0 : index
    %c0_13 = arith.constant 0 : index
    %17 = vector.load %arg6[%c0_12, %c0_13] : memref<128x128xbf16, #tpu.memory_space<vmem>>, vector<128x128xbf16>
    %cst_14 = arith.constant dense<0.000000e+00> : vector<8x128xf32>
    %18 = tpu.matmul %16, %17, %cst_14 {dimension_numbers = #tpu.dot_dimension_numbers<[1], [0], [0], [1], [0, 0, 1, 1], [], []>} : vector<8x128xbf16>, vector<128x128xbf16>, vector<8x128xf32> -> vector<8x128xf32>
    %c0_15 = arith.constant 0 : index
    %c0_16 = arith.constant 0 : index
    %19 = vector.load %arg7[%c0_15, %c0_16] : memref<1x128xf32, #tpu.memory_space<vmem>>, vector<1x128xf32>
    %20 = vector.broadcast %19 : vector<1x128xf32> to vector<8x128xf32>
    %21 = arith.addf %18, %20 : vector<8x128xf32>
    %cst_17 = arith.constant dense<0xFF800000> : vector<8xf32>
    %22 = vector.multi_reduction <maximumf>, %21, %cst_17 [1] : vector<8x128xf32> to vector<8xf32>
    %23 = vector.shape_cast %22 : vector<8xf32> to vector<8x1xf32>
    %24 = vector.broadcast %23 : vector<8x1xf32> to vector<8x128xf32>
    %25 = arith.subf %21, %24 : vector<8x128xf32>
    %26 = math.exp %25 : vector<8x128xf32>
    %cst_18 = arith.constant dense<0.000000e+00> : vector<8xf32>
    %27 = vector.multi_reduction <add>, %26, %cst_18 [1] : vector<8x128xf32> to vector<8xf32>
    %28 = vector.shape_cast %27 : vector<8xf32> to vector<8x1xf32>
    %29 = vector.broadcast %28 : vector<8x1xf32> to vector<8x128xf32>
    %30 = arith.divf %26, %29 : vector<8x128xf32>
    %31 = vector.extract_strided_slice %30 {offsets = [0, 0], sizes = [8, 8], strides = [1, 1]} : vector<8x128xf32> to vector<8x8xf32>
    %c0_19 = arith.constant 0 : index
    %c0_20 = arith.constant 0 : index
    %32 = vector.load %arg8[%c0_19, %c0_20] : memref<8x8xf32, #tpu.memory_space<vmem>>, vector<8x8xf32>
    tpu.vector_store %arg8[%c0_19, %c0_20], %31 {strides = array<i32>} : memref<8x8xf32, #tpu.memory_space<vmem>>, vector<8x8xf32>,
    return
  }
  func.func @transform_0(%arg0: i32) -> (i32, i32) {
    %c0_i32 = arith.constant 0 : i32
    %c0_i32_0 = arith.constant 0 : i32
    return %arg0, %c0_i32 : i32, i32
  }
  func.func @transform_1(%arg0: i32) -> (i32, i32) {
    %c0_i32 = arith.constant 0 : i32
    %c0_i32_0 = arith.constant 0 : i32
    %c0_i32_1 = arith.constant 0 : i32
    return %c0_i32, %c0_i32_0 : i32, i32
  }
  func.func @transform_2(%arg0: i32) -> (i32, i32) {
    %c0_i32 = arith.constant 0 : i32
    %c0_i32_0 = arith.constant 0 : i32
    %c0_i32_1 = arith.constant 0 : i32
    return %c0_i32, %c0_i32_0 : i32, i32
  }
  func.func @transform_3(%arg0: i32) -> (i32, i32) {
    %c0_i32 = arith.constant 0 : i32
    %c0_i32_0 = arith.constant 0 : i32
    %c0_i32_1 = arith.constant 0 : i32
    return %c0_i32, %c0_i32_0 : i32, i32
  }
  func.func @transform_4(%arg0: i32) -> (i32, i32) {
    %c0_i32 = arith.constant 0 : i32
    %c0_i32_0 = arith.constant 0 : i32
    %c0_i32_1 = arith.constant 0 : i32
    return %c0_i32, %c0_i32_0 : i32, i32
  }
  func.func @transform_5(%arg0: i32) -> (i32, i32) {
    %c0_i32 = arith.constant 0 : i32
    %c0_i32_0 = arith.constant 0 : i32
    %c0_i32_1 = arith.constant 0 : i32
    return %c0_i32, %c0_i32_0 : i32, i32
  }
  func.func @transform_6(%arg0: i32) -> (i32, i32) {
    %c0_i32 = arith.constant 0 : i32
    %c0_i32_0 = arith.constant 0 : i32
    %c0_i32_1 = arith.constant 0 : i32
    return %c0_i32, %c0_i32_0 : i32, i32
  }
  func.func @transform_7(%arg0: i32) -> (i32, i32) {
    %c0_i32 = arith.constant 0 : i32
    %c0_i32_0 = arith.constant 0 : i32
    return %arg0, %c0_i32 : i32, i32
  }
}

</mosaic_0001>

<llo_original>
// kernel: tpu_custom_call.1
$region0: #{tpu_custom_call.1}
  #allocation0 [shape = 'u32[]', space=smem, size = 0x4, offset = 0x4, fixed_abs, tag = 'smem constant byte address 0x4 - core index']
  #allocation1 [shape = 'u32[144,128]{1,0:T(1,128)}', space=vmem, size = 0x12000, scoped, tag = 'internal scratch']
  %s0 = inlined_call_operand.hbm [shape: f32[8,16], index: 0, kind: input, shape index: {}]
  %s1 = inlined_call_operand.hbm [shape: f32[16,128], index: 1, kind: input, shape index: {}]
  %s2 = inlined_call_operand.vmem [shape: f32[1,128], index: 2, kind: input, shape index: {}]
  %s3 = inlined_call_operand.hbm [shape: bf16[128,128], index: 3, kind: input, shape index: {}]
  %s4 = inlined_call_operand.vmem [shape: f32[1,128], index: 4, kind: input, shape index: {}]
  %s5 = inlined_call_operand.hbm [shape: bf16[128,128], index: 5, kind: input, shape index: {}]
  %s6 = inlined_call_operand.vmem [shape: f32[1,128], index: 6, kind: input, shape index: {}]
  %s7 = inlined_call_operand.hbm [shape: f32[8,8], index: 7, kind: output, shape index: {}]
  %s8 = sld [smem:[#allocation0]]
  $region54: #{tpu_custom_call.1} parent=0
    _
  %s10 = ssub.s32 1, %s8
  %s11 = scalar_select 0, %s10, %s8
  $region1: #{tpu_custom_call.1} parent=0
    #allocation2 [shape = 'u8[4096]{0}', space=vmem, size = 0x1000, scoped, tag = 'input window, operand 0, single buffered']
    #allocation3 [shape = 's32[1]{0}', space=sflag, size = 0x4, scoped, tag = 'scoped memory for tpu_custom_call.1']
    #allocation4 [shape = 's32[1]{0}', space=sflag, size = 0x4, scoped, tag = 'scoped memory for tpu_custom_call.1']
    #allocation5 [shape = 'u8[8192]{0}', space=vmem, size = 0x2000, scoped, tag = 'input window, operand 1, single buffered']
    #allocation6 [shape = 's32[1]{0}', space=sflag, size = 0x4, scoped, tag = 'scoped memory for tpu_custom_call.1']
    #allocation7 [shape = 'u8[32768]{0}', space=vmem, size = 0x8000, scoped, tag = 'input window, operand 3, single buffered']
    #allocation8 [shape = 'u8[32768]{0}', space=vmem, size = 0x8000, scoped, tag = 'input window, operand 5, single buffered']
    #allocation9 [shape = 's32[1]{0}', space=sflag, size = 0x4, scoped, tag = 'scoped memory for tpu_custom_call.1']
    #allocation10 [shape = 'u8[4096]{0}', space=vmem, size = 0x1000, scoped, tag = 'output window, operand 0, single buffered']
    %12 = vsyncpa [#allocation3], 0
    %13 = vsyncpa [#allocation6], 0
    %14 = vsyncpa [#allocation9], 0
    %15 = vsyncpa [#allocation4], 0
    // Predicated region
    $region2: #{tpu_custom_call.1} parent=1 // pred_check
      _
    $region3: #{tpu_custom_call.1} parent=1 // pred_check_branch
      %17 = sbr.rel (0) target = $region5
    $region4: #{tpu_custom_call.1} parent=1 // pred_region
      %s19 = ssub.s32 128, 128
      %20 = vsyncadd [#allocation3], %s19
      %s22 = sshll.u32 [#allocation2], 4
      %s23 = int_to_ptr.vmem [resolvable:$true] %s22
      %25 = dma.hbm_to_vmem [thread:$0]  %s0, 128, %s23, [#allocation3]
    $region5: #{tpu_custom_call.1} parent=1 // pred_fallthru
      _
    // Predicated region
    $region6: #{tpu_custom_call.1} parent=1 // pred_check
      _
    $region7: #{tpu_custom_call.1} parent=1 // pred_check_branch
      %27 = sbr.rel (0) target = $region9
    $region8: #{tpu_custom_call.1} parent=1 // pred_region
      %s29 = ssub.s32 256, 256
      %30 = vsyncadd [#allocation6], %s29
      %s31 = sshll.u32 [#allocation5], 4
      %s32 = int_to_ptr.vmem [resolvable:$true] %s31
      %37 = dma.hbm_to_vmem [thread:$0]  %s1, 256, %s32, [#allocation6], 128, 128, 8
    $region9: #{tpu_custom_call.1} parent=1 // pred_fallthru
      _
    // Predicated region
    $region10: #{tpu_custom_call.1} parent=1 // pred_check
      _
    $region11: #{tpu_custom_call.1} parent=1 // pred_check_branch
      %39 = sbr.rel (0) target = $region13
    $region12: #{tpu_custom_call.1} parent=1 // pred_region
      _
    $region13: #{tpu_custom_call.1} parent=1 // pred_fallthru
      _
    // Predicated region
    $region14: #{tpu_custom_call.1} parent=1 // pred_check
      _
    $region15: #{tpu_custom_call.1} parent=1 // pred_check_branch
      %41 = sbr.rel (0) target = $region17
    $region16: #{tpu_custom_call.1} parent=1 // pred_region
      %s43 = ssub.s32 1024, 1024
      %44 = vsyncadd [#allocation6], %s43
      %s45 = sshll.u32 [#allocation7], 4
      %s46 = int_to_ptr.vmem [resolvable:$true] %s45
      %51 = dma.hbm_to_vmem [thread:$0]  %s3, 1024, %s46, [#allocation6], 64, 64, 4
    $region17: #{tpu_custom_call.1} parent=1 // pred_fallthru
      _
    // Predicated region
    $region18: #{tpu_custom_call.1} parent=1 // pred_check
      _
    $region19: #{tpu_custom_call.1} parent=1 // pred_check_branch
      %53 = sbr.rel (0) target = $region21
    $region20: #{tpu_custom_call.1} parent=1 // pred_region
      _
    $region21: #{tpu_custom_call.1} parent=1 // pred_fallthru
      _
    // Predicated region
    $region22: #{tpu_custom_call.1} parent=1 // pred_check
      _
    $region23: #{tpu_custom_call.1} parent=1 // pred_check_branch
      %55 = sbr.rel (0) target = $region25
    $region24: #{tpu_custom_call.1} parent=1 // pred_region
      %s57 = ssub.s32 1024, 1024
      %58 = vsyncadd [#allocation9], %s57
      %s59 = sshll.u32 [#allocation8], 4
      %s60 = int_to_ptr.vmem [resolvable:$true] %s59
      %65 = dma.hbm_to_vmem [thread:$0]  %s5, 1024, %s60, [#allocation9], 64, 64, 4
    $region25: #{tpu_custom_call.1} parent=1 // pred_fallthru
      _
    // Predicated region
    $region26: #{tpu_custom_call.1} parent=1 // pred_check
      _
    $region27: #{tpu_custom_call.1} parent=1 // pred_check_branch
      %67 = sbr.rel (0) target = $region29
    $region28: #{tpu_custom_call.1} parent=1 // pred_region
      _
    $region29: #{tpu_custom_call.1} parent=1 // pred_fallthru
      _
    // Predicated region
    $region30: #{tpu_custom_call.1} parent=1 // pred_check
      _
    $region31: #{tpu_custom_call.1} parent=1 // pred_check_branch
      %69 = sbr.rel (0) target = $region33
    $region32: #{tpu_custom_call.1} parent=1 // pred_region
      %70 = dma.done [#allocation3], 128
    $region33: #{tpu_custom_call.1} parent=1 // pred_fallthru
      _
    // Predicated region
    $region34: #{tpu_custom_call.1} parent=1 // pred_check
      _
    $region35: #{tpu_custom_call.1} parent=1 // pred_check_branch
      %72 = sbr.rel (0) target = $region37
    $region36: #{tpu_custom_call.1} parent=1 // pred_region
      %73 = dma.done [#allocation6], 256
    $region37: #{tpu_custom_call.1} parent=1 // pred_fallthru
      _
    // Predicated region
    $region38: #{tpu_custom_call.1} parent=1 // pred_check
      _
    $region39: #{tpu_custom_call.1} parent=1 // pred_check_branch
      %75 = sbr.rel (0) target = $region41
    $region40: #{tpu_custom_call.1} parent=1 // pred_region
      %76 = dma.done [#allocation6], 1024
    $region41: #{tpu_custom_call.1} parent=1 // pred_fallthru
      _
    // Predicated region
    $region42: #{tpu_custom_call.1} parent=1 // pred_check
      _
    $region43: #{tpu_custom_call.1} parent=1 // pred_check_branch
      %78 = sbr.rel (0) target = $region45
    $region44: #{tpu_custom_call.1} parent=1 // pred_region
      %79 = dma.done [#allocation9], 1024
    $region45: #{tpu_custom_call.1} parent=1 // pred_fallthru
      _
    %v81 = vld [vmem:[#allocation2] sm:$0xff]
    %v82 = vld [vmem:[#allocation5] sm:$0xff]
    %v83 = vld [vmem:[#allocation5 + $0x8] sm:$0xff]
    %v84 = vld [vmem:[%s2] sm:$0x1]
    %v86 = vlaneseq
    %v87 = vshrl.u32 %v86, 7
    %v88 = vsub.s32 0, %v87
    %v89 = vrot.slane %v84, %v88
    %vm91 = vcmask 130048
    %v93 = vsel %vm91, %v81, 0
    %95 = vmatprep.subr.mxu0 0.0
    %96 = vmatpush1.msra.mxu0 0.0
    %97 = vmatprep.subr.mxu0 0.0
    %98 = vmatpush1.msra.mxu0 0.0
    %99 = vmatprep.subr.mxu0 0.0
    %100 = vmatpush1.msra.mxu0 0.0
    %101 = vmatprep.subr.mxu0 0.0
    %102 = vmatpush1.msra.mxu0 0.0
    %103 = vmatprep.subr.mxu0 0.0
    %104 = vmatpush1.msra.mxu0 0.0
    %105 = vmatprep.subr.mxu0 0.0
    %106 = vmatpush1.msra.mxu0 0.0
    %107 = vmatprep.subr.mxu0 0.0
    %108 = vmatpush1.msra.mxu0 0.0
    %109 = vmatprep.subr.mxu0 0.0
    %110 = vmatpush1.msra.mxu0 0.0
    %111 = vmatprep.subr.mxu0 0.0
    %112 = vmatpush1.msra.mxu0 0.0
    %113 = vmatprep.subr.mxu0 0.0
    %114 = vmatpush1.msra.mxu0 0.0
    %115 = vmatprep.subr.mxu0 0.0
    %116 = vmatpush1.msra.mxu0 0.0
    %117 = vmatprep.subr.mxu0 0.0
    %118 = vmatpush1.msra.mxu0 0.0
    %119 = vmatprep.subr.mxu0 0.0
    %120 = vmatpush1.msra.mxu0 0.0
    %121 = vmatprep.subr.mxu0 0.0
    %122 = vmatpush1.msra.mxu0 0.0
    %123 = vmatprep.subr.mxu0 0.0
    %124 = vmatpush1.msra.mxu0 %v83
    %125 = vmatprep.subr.mxu0 0.0
    %126 = vmatpush1.msra.mxu0 %v82
    %127 = vmatprep.subr.mxu0 0.0
    %128 = vmatpush2.msra.mxu0 0.0
    %129 = vmatprep.subr.mxu0 0.0
    %130 = vmatpush2.msra.mxu0 0.0
    %131 = vmatprep.subr.mxu0 0.0
    %132 = vmatpush2.msra.mxu0 0.0
    %133 = vmatprep.subr.mxu0 0.0
    %134 = vmatpush2.msra.mxu0 0.0
    %135 = vmatprep.subr.mxu0 0.0
    %136 = vmatpush2.msra.mxu0 0.0
    %137 = vmatprep.subr.mxu0 0.0
    %138 = vmatpush2.msra.mxu0 0.0
    %139 = vmatprep.subr.mxu0 0.0
    %140 = vmatpush2.msra.mxu0 0.0
    %141 = vmatprep.subr.mxu0 0.0
    %142 = vmatpush2.msra.mxu0 0.0
    %143 = vmatprep.subr.mxu0 0.0
    %144 = vmatpush2.msra.mxu0 0.0
    %145 = vmatprep.subr.mxu0 0.0
    %146 = vmatpush2.msra.mxu0 0.0
    %147 = vmatprep.subr.mxu0 0.0
    %148 = vmatpush2.msra.mxu0 0.0
    %149 = vmatprep.subr.mxu0 0.0
    %150 = vmatpush2.msra.mxu0 0.0
    %151 = vmatprep.subr.mxu0 0.0
    %152 = vmatpush2.msra.mxu0 0.0
    %153 = vmatprep.subr.mxu0 0.0
    %154 = vmatpush2.msra.mxu0 0.0
    %155 = vmatprep.subr.mxu0 0.0
    %156 = vmatpush2.msra.mxu0 0.0
    %157 = vmatprep.subr.mxu0 0.0
    %158 = vmatpush2.msra.mxu0 0.0
    %159 = vmatprep.mubr.f32.mxu0 0.0
    %160 = vmatmul.mubr.f32.gmra.mxu0 %v93
    %v161 = vpop.f32.mrf.mxu0
    %v162 = vadd.f32 %v89, %v161
    %v163 = vpop.f32.mrf.mxu0
    %164 = vdwg.mxu0
    %v165 = vmax.f32 %v162, 0.0
    %v166 = vpack.c.bf16 %v165, %v165
    %v167 = vld [vmem:[#allocation7] sm:$0xf]
    %v168 = vld [vmem:[#allocation7 + $0x4] sm:$0xf]
    %v169 = vld [vmem:[#allocation7 + $0x8] sm:$0xf]
    %v170 = vld [vmem:[#allocation7 + $0xc] sm:$0xf]
    %v171 = vld [vmem:[#allocation7 + $0x10] sm:$0xf]
    %v172 = vld [vmem:[#allocation7 + $0x14] sm:$0xf]
    %v173 = vld [vmem:[#allocation7 + $0x18] sm:$0xf]
    %v174 = vld [vmem:[#allocation7 + $0x1c] sm:$0xf]
    %v175 = vld [vmem:[#allocation7 + $0x20] sm:$0xf]
    %v176 = vld [vmem:[#allocation7 + $0x24] sm:$0xf]
    %v177 = vld [vmem:[#allocation7 + $0x28] sm:$0xf]
    %v178 = vld [vmem:[#allocation7 + $0x2c] sm:$0xf]
    %v179 = vld [vmem:[#allocation7 + $0x30] sm:$0xf]
    %v180 = vld [vmem:[#allocation7 + $0x34] sm:$0xf]
    %v181 = vld [vmem:[#allocation7 + $0x38] sm:$0xf]
    %v182 = vld [vmem:[#allocation7 + $0x3c] sm:$0xf]
    %v183 = vld [vmem:[%s4] sm:$0x1]
    %v185 = vlaneseq
    %v186 = vshrl.u32 %v185, 7
    %v187 = vsub.s32 0, %v186
    %v188 = vrot.slane %v183, %v187
    %v206 = vunpack.c.l.b16 %v167
    %v207 = vunpack.c.l.b16 %v168
    %v208 = vunpack.c.l.b16 %v169
    %v209 = vunpack.c.l.b16 %v170
    %v210 = vunpack.c.l.b16 %v171
    %v211 = vunpack.c.l.b16 %v172
    %v212 = vunpack.c.l.b16 %v173
    %v213 = vunpack.c.l.b16 %v174
    %v214 = vunpack.c.l.b16 %v175
    %v215 = vunpack.c.l.b16 %v176
    %v216 = vunpack.c.l.b16 %v177
    %v217 = vunpack.c.l.b16 %v178
    %v218 = vunpack.c.l.b16 %v179
    %v219 = vunpack.c.l.b16 %v180
    %v220 = vunpack.c.l.b16 %v181
    %v221 = vunpack.c.l.b16 %v182
    %v222 = vpack.c.b16 %v207, %v206
    %v223 = vpack.c.b16 %v209, %v208
    %v224 = vpack.c.b16 %v211, %v210
    %v225 = vpack.c.b16 %v213, %v212
    %v226 = vpack.c.b16 %v215, %v214
    %v227 = vpack.c.b16 %v217, %v216
    %v228 = vpack.c.b16 %v219, %v218
    %v229 = vpack.c.b16 %v221, %v220
    %238 = vmatprep.subr.bf16.mxu0 0
    %239 = vmatpush1.bf16.msra.mxu0 %v229
    %240 = vmatprep.subr.bf16.mxu0 0
    %241 = vmatpush1.bf16.msra.mxu0 %v228
    %242 = vmatprep.subr.bf16.mxu0 0
    %243 = vmatpush1.bf16.msra.mxu0 %v227
    %244 = vmatprep.subr.bf16.mxu0 0
    %245 = vmatpush1.bf16.msra.mxu0 %v226
    %246 = vmatprep.subr.bf16.mxu0 0
    %247 = vmatpush1.bf16.msra.mxu0 %v225
    %248 = vmatprep.subr.bf16.mxu0 0
    %249 = vmatpush1.bf16.msra.mxu0 %v224
    %250 = vmatprep.subr.bf16.mxu0 0
    %251 = vmatpush1.bf16.msra.mxu0 %v223
    %252 = vmatprep.subr.bf16.mxu0 0
    %253 = vmatpush1.bf16.msra.mxu0 %v222
    %254 = vmatprep.subr.bf16.mxu0 0
    %255 = vmatpush2.bf16.msra.mxu0 0
    %256 = vmatprep.subr.bf16.mxu0 0
    %257 = vmatpush2.bf16.msra.mxu0 0
    %258 = vmatprep.subr.bf16.mxu0 0
    %259 = vmatpush2.bf16.msra.mxu0 0
    %260 = vmatprep.subr.bf16.mxu0 0
    %261 = vmatpush2.bf16.msra.mxu0 0
    %262 = vmatprep.subr.bf16.mxu0 0
    %263 = vmatpush2.bf16.msra.mxu0 0
    %264 = vmatprep.subr.bf16.mxu0 0
    %265 = vmatpush2.bf16.msra.mxu0 0
    %266 = vmatprep.subr.bf16.mxu0 0
    %267 = vmatpush2.bf16.msra.mxu0 0
    %268 = vmatprep.subr.bf16.mxu0 0
    %269 = vmatpush2.bf16.msra.mxu0 0
    %270 = vmatprep.mubr.bf16.mxu0 0
    %271 = vmatmul.mubr.bf16.gmra.mxu0 %v166
    %v272 = vpop.f32.mrf.mxu0
    %v273 = vadd.f32 %v188, %v272
    %v274 = vpop.f32.mrf.mxu0
    %v275 = vpop.f32.mrf.mxu0
    %v276 = vpop.f32.mrf.mxu0
    %277 = vdwg.mxu0
    %v278 = vmax.f32 %v273, 0.0
    %v279 = vpack.c.bf16 %v278, %v278
    %v280 = vld [vmem:[#allocation8] sm:$0xf]
    %v281 = vld [vmem:[#allocation8 + $0x4] sm:$0xf]
    %v282 = vld [vmem:[#allocation8 + $0x8] sm:$0xf]
    %v283 = vld [vmem:[#allocation8 + $0xc] sm:$0xf]
    %v284 = vld [vmem:[#allocation8 + $0x10] sm:$0xf]
    %v285 = vld [vmem:[#allocation8 + $0x14] sm:$0xf]
    %v286 = vld [vmem:[#allocation8 + $0x18] sm:$0xf]
    %v287 = vld [vmem:[#allocation8 + $0x1c] sm:$0xf]
    %v288 = vld [vmem:[#allocation8 + $0x20] sm:$0xf]
    %v289 = vld [vmem:[#allocation8 + $0x24] sm:$0xf]
    %v290 = vld [vmem:[#allocation8 + $0x28] sm:$0xf]
    %v291 = vld [vmem:[#allocation8 + $0x2c] sm:$0xf]
    %v292 = vld [vmem:[#allocation8 + $0x30] sm:$0xf]
    %v293 = vld [vmem:[#allocation8 + $0x34] sm:$0xf]
    %v294 = vld [vmem:[#allocation8 + $0x38] sm:$0xf]
    %v295 = vld [vmem:[#allocation8 + $0x3c] sm:$0xf]
    %v296 = vld [vmem:[%s6] sm:$0x1]
    %v298 = vlaneseq
    %v299 = vshrl.u32 %v298, 7
    %v300 = vsub.s32 0, %v299
    %v301 = vrot.slane %v296, %v300
    %v319 = vunpack.c.l.b16 %v280
    %v320 = vunpack.c.l.b16 %v281
    %v321 = vunpack.c.l.b16 %v282
    %v322 = vunpack.c.l.b16 %v283
    %v323 = vunpack.c.l.b16 %v284
    %v324 = vunpack.c.l.b16 %v285
    %v325 = vunpack.c.l.b16 %v286
    %v326 = vunpack.c.l.b16 %v287
    %v327 = vunpack.c.l.b16 %v288
    %v328 = vunpack.c.l.b16 %v289
    %v329 = vunpack.c.l.b16 %v290
    %v330 = vunpack.c.l.b16 %v291
    %v331 = vunpack.c.l.b16 %v292
    %v332 = vunpack.c.l.b16 %v293
    %v333 = vunpack.c.l.b16 %v294
    %v334 = vunpack.c.l.b16 %v295
    %v335 = vpack.c.b16 %v320, %v319
    %v336 = vpack.c.b16 %v322, %v321
    %v337 = vpack.c.b16 %v324, %v323
    %v338 = vpack.c.b16 %v326, %v325
    %v339 = vpack.c.b16 %v328, %v327
    %v340 = vpack.c.b16 %v330, %v329
    %v341 = vpack.c.b16 %v332, %v331
    %v342 = vpack.c.b16 %v334, %v333
    %351 = vmatprep.subr.bf16.mxu0 0
    %352 = vmatpush1.bf16.msra.mxu0 %v342
    %353 = vmatprep.subr.bf16.mxu0 0
    %354 = vmatpush1.bf16.msra.mxu0 %v341
    %355 = vmatprep.subr.bf16.mxu0 0
    %356 = vmatpush1.bf16.msra.mxu0 %v340
    %357 = vmatprep.subr.bf16.mxu0 0
    %358 = vmatpush1.bf16.msra.mxu0 %v339
    %359 = vmatprep.subr.bf16.mxu0 0
    %360 = vmatpush1.bf16.msra.mxu0 %v338
    %361 = vmatprep.subr.bf16.mxu0 0
    %362 = vmatpush1.bf16.msra.mxu0 %v337
    %363 = vmatprep.subr.bf16.mxu0 0
    %364 = vmatpush1.bf16.msra.mxu0 %v336
    %365 = vmatprep.subr.bf16.mxu0 0
    %366 = vmatpush1.bf16.msra.mxu0 %v335
    %367 = vmatprep.subr.bf16.mxu0 0
    %368 = vmatpush2.bf16.msra.mxu0 0
    %369 = vmatprep.subr.bf16.mxu0 0
    %370 = vmatpush2.bf16.msra.mxu0 0
    %371 = vmatprep.subr.bf16.mxu0 0
    %372 = vmatpush2.bf16.msra.mxu0 0
    %373 = vmatprep.subr.bf16.mxu0 0
    %374 = vmatpush2.bf16.msra.mxu0 0
    %375 = vmatprep.subr.bf16.mxu0 0
    %376 = vmatpush2.bf16.msra.mxu0 0
    %377 = vmatprep.subr.bf16.mxu0 0
    %378 = vmatpush2.bf16.msra.mxu0 0
    %379 = vmatprep.subr.bf16.mxu0 0
    %380 = vmatpush2.bf16.msra.mxu0 0
    %381 = vmatprep.subr.bf16.mxu0 0
    %382 = vmatpush2.bf16.msra.mxu0 0
    %383 = vmatprep.mubr.bf16.mxu0 0
    %384 = vmatmul.mubr.bf16.gmra.mxu0 %v279
    %v385 = vpop.f32.mrf.mxu0
    %v386 = vadd.f32 %v301, %v385
    %v387 = vpop.f32.mrf.mxu0
    %v388 = vpop.f32.mrf.mxu0
    %v389 = vpop.f32.mrf.mxu0
    %390 = vdwg.mxu0
    %391 = vmax.xlane.f32.xlu0 %v386
    %v392 = vpop.xlane.xlu0 %391
    %v393 = vsub.f32 %v386, %v392
    %v394 = vmul.f32 %v393, 1.442695
    %v395 = vpow.pop %v394
    %396 = vadd.xlane.f32.xlu0 %v395
    %v397 = vpop.xlane.xlu0 %396
    %v398 = vrcp.pop %v397
    %v399 = vmul.f32 %v395, %v398
    %vm400 = vcmask 64512
    %401 = vst.msk [vmem:[#allocation10] sm:$0xff] %vm400, %v399
    // Predicated region
    $region46: #{tpu_custom_call.1} parent=1 // pred_check
      _
    $region47: #{tpu_custom_call.1} parent=1 // pred_check_branch
      %403 = sbr.rel (0) target = $region49
    $region48: #{tpu_custom_call.1} parent=1 // pred_region
      %s405 = ssub.s32 128, 128
      %406 = vsyncadd [#allocation4], %s405
      %s408 = sshll.u32 [#allocation10], 4
      %s409 = int_to_ptr.vmem [resolvable:$true] %s408
      %411 = dma.vmem_to_hbm [thread:$0]  %s409, 128, %s7, [#allocation4]
    $region49: #{tpu_custom_call.1} parent=1 // pred_fallthru
      _
    // Predicated region
    $region50: #{tpu_custom_call.1} parent=1 // pred_check
      _
    $region51: #{tpu_custom_call.1} parent=1 // pred_check_branch
      %413 = sbr.rel (0) target = $region53
    $region52: #{tpu_custom_call.1} parent=1 // pred_region
      %414 = dma.done [#allocation4], 128
    $region53: #{tpu_custom_call.1} parent=1 // pred_fallthru
      _
    %415 = vsyncpa [#allocation3], 1
    %416 = vsyncpa [#allocation6], 1
    %417 = vsyncpa [#allocation9], 1
    %418 = vsyncpa [#allocation4], 1

</llo_original>
